<compile_context>
chip_gen: v6e
topology: v6e:2x2x1
jax: 0.10.0
libtpu: 0.0.40
codegen_flags: <defaults>
</compile_context>

<pallas_src>
import functools

import jax
import jax.numpy as jnp
from jax import lax
from jax.experimental import pallas as pl
from jax.experimental.pallas import tpu as pltpu

# ----------------------------- synthetic hparams -----------------------------
HP = dict(
    n_mel=8,
    prenet_chn=16, prenet_depth=2,
    postnet_chn=16, postnet_ker=5, postnet_depth=3,
    enc_chn=16, spk_chn=8,
    attn_rnn=32, dec_rnn=32,          # 4*hid = 128 -> fused gate slabs fill the lane axis
    attn_dim=16, static_chn=8, static_ker=7,
    zoneout=0.1,
    mask_padding=True,
    teacher_force_rate=1.0,           # rate == 1.0 -> always teacher forcing (deterministic)
)

LANE = 128


def _round_up(x, m):
    return ((x + m - 1) // m) * m


def _vmem():
    return pl.BlockSpec(memory_space=pltpu.MemorySpace.VMEM)


def _shift_lanes(x, s):
    """out[..., t] = x[..., t + s] if 0 <= t+s < width else 0   (static s)."""
    if s == 0:
        return x
    width = x.shape[-1]
    rolled = jnp.roll(x, -s, axis=-1)                       # static shift -> slice + concat
    lane = lax.broadcasted_iota(jnp.int32, x.shape, x.ndim - 1)
    valid = jnp.logical_and(lane + s >= 0, lane + s < width)
    return jnp.where(valid, rolled, jnp.float32(0.0))


# ------------- prologue: PreNet (relu+dropout) and processed-memory proj ------
def _prologue_kernel(x_ref, mem_ref, wmem_ref, bmem_ref, *rest):
    pre_out, pm_out = rest[-2], rest[-1]
    wbm = rest[:-2]                                         # (w, b, mask) per prenet layer
    n_layers = len(wbm) // 3
    h = x_ref[...]
    for li in range(n_layers):
        w = wbm[3 * li][...]
        b = wbm[3 * li + 1][...]
        m = wbm[3 * li + 2][...]
        h = jnp.maximum(jnp.dot(h, w, preferred_element_type=jnp.float32) + b, 0.0)
        h = h * m          # pre-scaled dropout mask (generated host-side; no on-chip PRNG)
    pre_out[...] = h
    pm_out[...] = (jnp.dot(mem_ref[...], wmem_ref[...],
                           preferred_element_type=jnp.float32) + bmem_ref[...])


def prologue_forward(prenet_params, x_flat, masks, mem_flat, wmem, bmem):
    out_dim = prenet_params[-1][0].shape[1]
    operands = [x_flat, mem_flat, wmem, bmem]
    for (w, b), m in zip(prenet_params, masks):
        operands += [w, b, m]
    out_shape = (jax.ShapeDtypeStruct((x_flat.shape[0], out_dim), jnp.float32),
                 jax.ShapeDtypeStruct((mem_flat.shape[0], wmem.shape[1]), jnp.float32))
    return pl.pallas_call(
        _prologue_kernel,
        out_shape=out_shape,
        in_specs=[_vmem()] * len(operands),
        out_specs=(_vmem(), _vmem()),
    )(*operands)


# ----------------------- fused autoregressive decoder -------------------------
def _decoder_kernel(pre_ref, mem_ref, pm_ref, mask_ref,
                    a_wx, a_wc, a_whh, a_b,
                    d_wx, d_wc, d_whh, d_b,
                    wq_ref, wloc_ref, v_ref,
                    mw_h, mw_c, mb_ref,
                    mel_ref, align_ref, *, zoneout):
    T_dec, B, _ = pre_ref.shape
    _, M, TE_PAD = mem_ref.shape
    AR = a_whh.shape[0]
    DR = d_whh.shape[0]
    Ks = wloc_ref.shape[0]
    A = wq_ref.shape[1]
    T_out = align_ref.shape[2]
    pad_loc = (Ks - 1) // 2
    z = jnp.float32(zoneout)

    def zoneout_lstm(gates, h_old, c_old, hid):
        # fused (B, 4*hid) gate slab -> static 32-lane slices per gate
        gi = jax.nn.sigmoid(gates[:, 0 * hid:1 * hid])
        gf = jax.nn.sigmoid(gates[:, 1 * hid:2 * hid])
        gg = jnp.tanh(gates[:, 2 * hid:3 * hid])
        go = jax.nn.sigmoid(gates[:, 3 * hid:4 * hid])
        c_new = gf * c_old + gi * gg
        h_new = go * jnp.tanh(c_new)
        # TODO(synk): ZoneoutLSTMCell source unavailable; deterministic
        # (inference-form) zoneout: interpolate new state with previous state.
        c_out = z * c_old + (1.0 - z) * c_new
        h_out = z * h_old + (1.0 - z) * h_new
        return h_out, c_out

    def step(t, carry):
        attn_h, attn_c, dec_h, dec_c, prev_attn, context = carry

        x_t = pre_ref[t]                                           # (B, P)

        # --- attention LSTM: fused gates (B, 4*AR = 128) ---
        g_a = (jnp.dot(x_t, a_wx[...], preferred_element_type=jnp.float32)
               + jnp.dot(context, a_wc[...], preferred_element_type=jnp.float32)
               + jnp.dot(attn_h, a_whh[...], preferred_element_type=jnp.float32)
               + a_b[...])
        attn_h, attn_c = zoneout_lstm(g_a, attn_h, attn_c, AR)

        # --- location-sensitive attention, T_enc on the lane axis ---
        q = jnp.dot(attn_h, wq_ref[...], preferred_element_type=jnp.float32)   # (B, A)
        wloc = wloc_ref[...]                                        # (Ks, A, 1)
        lp = jnp.zeros((B, A, TE_PAD), jnp.float32)
        for j in range(Ks):                                         # 7 broadcast-FMAs
            shifted = _shift_lanes(prev_attn, j - pad_loc)          # (B, TE_PAD)
            lp = lp + wloc[j] * shifted[:, None, :]                 # (B, A, TE_PAD)
        e = jnp.tanh(q[:, :, None] + lp + pm_ref[...])              # (B, A, TE_PAD)
        scores = jnp.sum(v_ref[...] * e, axis=1) + mask_ref[...]    # (B, TE_PAD) lane-dense
        scores = scores - jnp.max(scores, axis=-1, keepdims=True)
        w = jnp.exp(scores)
        w = w / jnp.sum(w, axis=-1, keepdims=True)                  # exact divide (parity)
        context = jnp.sum(mem_ref[...] * w[:, None, :], axis=-1)    # (B, M)
        prev_attn = w

        # --- decoder LSTM: fused gates (B, 4*DR = 128) ---
        g_d = (jnp.dot(attn_h, d_wx[...], preferred_element_type=jnp.float32)
               + jnp.dot(context, d_wc[...], preferred_element_type=jnp.float32)
               + jnp.dot(dec_h, d_whh[...], preferred_element_type=jnp.float32)
               + d_b[...])
        dec_h, dec_c = zoneout_lstm(g_d, dec_h, dec_c, DR)

        # --- mel projection ---
        mel = (jnp.dot(dec_h, mw_h[...], preferred_element_type=jnp.float32)
               + jnp.dot(context, mw_c[...], preferred_element_type=jnp.float32)
               + mb_ref[...])                                       # (B, n_mel)

        mel_ref[t] = mel
        align_ref[t] = w[:, :T_out]
        return (attn_h, attn_c, dec_h, dec_c, prev_attn, context)

    lane = lax.broadcasted_iota(jnp.int32, (B, TE_PAD), 1)
    init = (jnp.zeros((B, AR), jnp.float32), jnp.zeros((B, AR), jnp.float32),
            jnp.zeros((B, DR), jnp.float32), jnp.zeros((B, DR), jnp.float32),
            jnp.where(lane == 0, jnp.float32(1.0), jnp.float32(0.0)),  # prev_attn[:,0]=1
            jnp.zeros((B, M), jnp.float32))
    lax.fori_loop(0, T_dec, step, init)


def decoder_recurrence(params, pre_dec, mem_T, pm_T, mask_add, T_enc):
    T_dec, B, _ = pre_dec.shape
    n_mel = params['mel_fc']['Wh'].shape[1]
    wloc3 = params['attn']['Wloc'][:, :, None]          # (Ks, A, 1) -> broadcast-ready
    v2 = params['attn']['v']                            # (A, 1)

    kern = functools.partial(_decoder_kernel, zoneout=HP['zoneout'])
    out_shape = (jax.ShapeDtypeStruct((T_dec, B, n_mel), jnp.float32),
                 jax.ShapeDtypeStruct((T_dec, B, T_enc), jnp.float32))
    operands = (pre_dec, mem_T, pm_T, mask_add,
                params['attn_rnn']['wx'], params['attn_rnn']['wc'],
                params['attn_rnn']['whh'], params['attn_rnn']['b'],
                params['dec_rnn']['wx'], params['dec_rnn']['wc'],
                params['dec_rnn']['whh'], params['dec_rnn']['b'],
                params['attn']['Wq'], wloc3, v2,
                params['mel_fc']['Wh'], params['mel_fc']['Wc'], params['mel_fc']['b'])
    # Single ungridded invocation: whole batch on sublanes, time as an
    # in-kernel fori_loop (zero per-step grid/pipeline overhead).
    # TODO(synk): for large B, add a batch-tile grid axis marked parallel /
    # CORE_PARALLEL to shard across the two TensorCores on v7x.
    return pl.pallas_call(
        kern,
        out_shape=out_shape,
        in_specs=[_vmem()] * len(operands),
        out_specs=(_vmem(), _vmem()),
    )(*operands)


# ----------------------------- PostNet (fused) --------------------------------
def _postnet_kernel(x_ref, *rest):
    o_ref = rest[-1]
    wbs = rest[:-1]
    n_layers = len(wbs) // 2
    x = x_ref[...]                          # (B*C0, T): T on lanes, batch*chan on sublanes
    T = x.shape[1]
    for li in range(n_layers):
        w = wbs[2 * li][...]                # (K, B*Cout, B*Cin) block-diag over batch (BN folded)
        b = wbs[2 * li + 1][...]            # (B*Cout, 1)
        K = w.shape[0]
        pad = (K - 1) // 2
        acc = jnp.zeros((w.shape[1], T), jnp.float32)
        for j in range(K):                  # K MXU matmuls per layer, lanes = T
            xs = _shift_lanes(x, j - pad)
            acc = acc + jnp.dot(w[j], xs, preferred_element_type=jnp.float32)
        acc = acc + b
        if li < n_layers - 1:
            acc = jnp.tanh(acc)
            # TODO(synk): PostNet nn.Dropout(0.5) is identity in eval mode.
        x = acc
    o_ref[...] = x


def postnet_forward(postnet_params, mel_ncw):
    # mel_ncw: (B, n_mel, T).  Eval-mode BatchNorm (running stats) folded into
    # the conv weights/bias; conv is block-diagonalised over the batch so all
    # rows go through one matmul per tap.
    B, n_mel, T = mel_ncw.shape
    eye_b = jnp.eye(B, dtype=jnp.float32)
    operands = [mel_ncw.reshape(B * n_mel, T)]
    for layer in postnet_params:
        w = layer['w']                                  # (K, Cin, Cout)
        b = layer['b'].reshape(-1)                      # (Cout,)
        if 'gamma' in layer:
            scale = layer['gamma'] * jax.lax.rsqrt(layer['rvar'] + 1e-5)
            w = w * scale[None, None, :]
            b = (b - layer['rmean']) * scale + layer['beta']
        w_t = jnp.transpose(w, (0, 2, 1))               # (K, Cout, Cin)
        w_bd = jnp.stack([jnp.kron(eye_b, w_t[k]) for k in range(w.shape[0])], axis=0)
        operands += [w_bd, jnp.tile(b, B)[:, None]]
    out = pl.pallas_call(
        _postnet_kernel,
        out_shape=jax.ShapeDtypeStruct((B * n_mel, T), jnp.float32),
        in_specs=[_vmem()] * len(operands),
        out_specs=_vmem(),
    )(*operands)
    return out.reshape(B, n_mel, T)


# ------------------------------ parameter init --------------------------------
def init_params(key):
    def nrm(k, shape, scale=0.1):
        return scale * jax.random.normal(k, shape, jnp.float32)

    keys = iter(jax.random.split(key, 64))
    n_mel, P = HP['n_mel'], HP['prenet_chn']
    M = HP['enc_chn'] + HP['spk_chn']
    A, S, Ks = HP['attn_dim'], HP['static_chn'], HP['static_ker']
    AR, DR = HP['attn_rnn'], HP['dec_rnn']

    params = {'go_frame': nrm(next(keys), (1, n_mel), 1.0)}

    sizes = [n_mel] + [P] * HP['prenet_depth']
    params['prenet'] = [(nrm(next(keys), (i, o)), nrm(next(keys), (1, o)))
                        for i, o in zip(sizes[:-1], sizes[1:])]

    def lstm(in_a, in_b, hid):
        # fused gate slabs (in, 4*hid): one N=128 MXU matmul per input stream;
        # input weights pre-split into the two concatenated input parts.
        return dict(wx=nrm(next(keys), (in_a, 4 * hid)),
                    wc=nrm(next(keys), (in_b, 4 * hid)),
                    whh=nrm(next(keys), (hid, 4 * hid)),
                    b=nrm(next(keys), (1, 4 * hid)))

    params['attn_rnn'] = lstm(P, M, AR)
    params['dec_rnn'] = lstm(AR, M, DR)

    # TODO(synk): Attention class source not provided; location-sensitive
    # attention (query proj + static location conv folded into the energy
    # projection + tanh energy + masked softmax).
    static_filt = nrm(next(keys), (S, Ks))
    wloc_proj = nrm(next(keys), (S, A))
    params['attn'] = dict(
        Wq=nrm(next(keys), (AR, A)),
        Wmem=nrm(next(keys), (M, A)),
        bmem=nrm(next(keys), (1, A)),
        Wloc=static_filt.T @ wloc_proj,          # (Ks, A)
        v=nrm(next(keys), (A, 1)))

    params['mel_fc'] = dict(Wh=nrm(next(keys), (DR, n_mel)),
                            Wc=nrm(next(keys), (M, n_mel)),
                            b=nrm(next(keys), (1, n_mel)))

    pc, Kp, depth = HP['postnet_chn'], HP['postnet_ker'], HP['postnet_depth']
    chans = [n_mel] + [pc] * (depth - 1) + [n_mel]
    post = []
    for li, (ci, co) in enumerate(zip(chans[:-1], chans[1:])):
        layer = dict(w=nrm(next(keys), (Kp, ci, co)),
                     b=nrm(next(keys), (1, 1, co)))
        if li < depth - 1:
            layer.update(gamma=jnp.ones((co,), jnp.float32),
                         beta=jnp.zeros((co,), jnp.float32),
                         rmean=jnp.zeros((co,), jnp.float32),
                         rvar=jnp.ones((co,), jnp.float32))
        post.append(layer)
    params['postnet'] = post
    return params


# --------------------------------- forward ------------------------------------
def tts_decoder_forward(params, x, memory, memory_lengths, output_lengths,
                        max_input_len, prenet_dropout=0.5, dropout_seed=0):
    """TTSDecoder.forward.  `max_input_len` is treated as a static python int."""
    B, n_mel, T_dec = x.shape
    _, T_enc, M = memory.shape
    TE_PAD = _round_up(max(T_enc, LANE), LANE)
    max_len = int(max_input_len if jnp.ndim(max_input_len) == 0
                  else max_input_len[0])
    A = params['attn']['Wq'].shape[1]
    P = params['prenet'][-1][0].shape[1]

    # ---- prologue: PreNet over [go ; teacher frames] + processed memory ----
    go = jnp.broadcast_to(params['go_frame'], (1, B, n_mel))
    xs = jnp.concatenate([go, jnp.transpose(x, (2, 0, 1))], axis=0)   # (T_dec+1, B, n_mel)
    n_rows = (T_dec + 1) * B
    keep = 1.0 - float(prenet_dropout)
    mkeys = jax.random.split(jax.random.PRNGKey(dropout_seed), len(params['prenet']))
    masks = []
    for (w, _), k in zip(params['prenet'], mkeys):
        od = w.shape[1]
        if keep < 1.0:
            m = (jax.random.uniform(k, (n_rows, od)) < keep).astype(jnp.float32) / keep
        else:
            m = jnp.ones((n_rows, od), jnp.float32)
        masks.append(m)

    mem_p = jnp.pad(memory, ((0, 0), (0, TE_PAD - T_enc), (0, 0)))    # (B, TE_PAD, M)
    pre, pm = prologue_forward(params['prenet'], xs.reshape(n_rows, n_mel), masks,
                               mem_p.reshape(B * TE_PAD, M),
                               params['attn']['Wmem'], params['attn']['bmem'])
    # teacher_force_rate == 1.0 -> always teacher forced: steps consume pre[0..T_dec-1].
    # TODO(synk): scheduled sampling (teacher-force rate < 1) is not supported
    # by the fused recurrence kernel.
    pre_dec = pre.reshape(T_dec + 1, B, P)[:T_dec]                    # (T_dec, B, P)

    # Transposed attention operands: encoder axis on (dense) lanes.
    pm_T = jnp.transpose(pm.reshape(B, TE_PAD, A), (0, 2, 1))          # (B, A, TE_PAD)
    mem_T = jnp.transpose(mem_p, (0, 2, 1))                            # (B, M, TE_PAD)
    mask_add = jnp.where(jnp.arange(TE_PAD)[None, :] < memory_lengths[:, None],
                         0.0, -1e9).astype(jnp.float32)                # (B, TE_PAD)

    # ---- fused autoregressive recurrence (single kernel invocation) ----
    mel_tbn, align_tbn = decoder_recurrence(params, pre_dec, mem_T, pm_T,
                                            mask_add, T_enc)

    mel_outputs = jnp.transpose(mel_tbn, (1, 2, 0))        # (B, n_mel, T_dec)
    alignments = jnp.transpose(align_tbn, (1, 0, 2))       # (B, T_dec, T_enc)

    # ---- PostNet residual (one fused kernel) ----
    resid = postnet_forward(params['postnet'], mel_outputs)
    mel_postnet = mel_outputs + resid

    pad_amt = max(max_len - T_enc, 0)
    if pad_amt > 0:
        alignments = jnp.pad(alignments, ((0, 0), (0, 0), (0, pad_amt)))

    # mask_output (hp.train.mask_padding = True)
    if HP['mask_padding'] and output_lengths is not None:
        keep_t = (jnp.arange(T_dec)[None, :] < output_lengths[:, None]).astype(jnp.float32)
        mel_outputs = mel_outputs * keep_t[:, None, :]
        mel_postnet = mel_postnet * keep_t[:, None, :]

    return mel_outputs, mel_postnet, alignments


# ----------------------------------- main --------------------------------------
if __name__ == "__main__":
    root = jax.random.PRNGKey(0)
    kp, kx, kmem = jax.random.split(root, 3)

    params = init_params(kp)

    B, T_dec, T_enc = 2, 8, 8
    x = jax.random.normal(kx, (B, HP['n_mel'], T_dec), jnp.float32)   # (B, n_mel, T_dec)
    memory = jax.random.normal(kmem, (B, T_enc, HP['enc_chn'] + HP['spk_chn']),
                               jnp.float32)
    memory_lengths = jnp.array([8, 6], jnp.int32)
    output_lengths = jnp.array([8, 5], jnp.int32)
    max_input_len = T_enc   # static python int (see tts_decoder_forward note)

    mel_outputs, mel_postnet, alignments = tts_decoder_forward(
        params, x, memory, memory_lengths, output_lengths, max_input_len,
        prenet_dropout=0.5, dropout_seed=1234)

    jax.block_until_ready((mel_outputs, mel_postnet, alignments))
    assert mel_outputs.shape == (B, HP['n_mel'], T_dec)
    assert mel_postnet.shape == (B, HP['n_mel'], T_dec)
    assert alignments.shape == (B, T_dec, max_input_len)
    assert bool(jnp.all(jnp.isfinite(mel_postnet)))
    assert bool(jnp.all(jnp.isfinite(alignments)))
    print("KERNEL_OK")
</pallas_src>

<mosaic_0001>
module attributes {stable_mosaic.version = 11 : i64} {
  func.func @_prologue_kernel(%arg0: memref<18x8xf32, #tpu.memory_space<vmem>>, %arg1: memref<256x24xf32, #tpu.memory_space<vmem>>, %arg2: memref<24x16xf32, #tpu.memory_space<vmem>>, %arg3: memref<1x16xf32, #tpu.memory_space<vmem>>, %arg4: memref<8x16xf32, #tpu.memory_space<vmem>>, %arg5: memref<1x16xf32, #tpu.memory_space<vmem>>, %arg6: memref<18x16xf32, #tpu.memory_space<vmem>>, %arg7: memref<16x16xf32, #tpu.memory_space<vmem>>, %arg8: memref<1x16xf32, #tpu.memory_space<vmem>>, %arg9: memref<18x16xf32, #tpu.memory_space<vmem>>, %arg10: memref<18x16xf32, #tpu.memory_space<vmem>>, %arg11: memref<256x16xf32, #tpu.memory_space<vmem>>) attributes {dimension_semantics = [], scalar_prefetch = 0 : i64, scratch_operands = 0 : i64, tpu.core_type = #tpu.core_type<tc>} {
    %c0 = arith.constant 0 : index
    %c0_0 = arith.constant 0 : index
    %0 = vector.load %arg0[%c0, %c0_0] : memref<18x8xf32, #tpu.memory_space<vmem>>, vector<18x8xf32>
    %c0_1 = arith.constant 0 : index
    %c0_2 = arith.constant 0 : index
    %1 = vector.load %arg4[%c0_1, %c0_2] : memref<8x16xf32, #tpu.memory_space<vmem>>, vector<8x16xf32>
    %c0_3 = arith.constant 0 : index
    %c0_4 = arith.constant 0 : index
    %2 = vector.load %arg5[%c0_3, %c0_4] : memref<1x16xf32, #tpu.memory_space<vmem>>, vector<1x16xf32>
    %c0_5 = arith.constant 0 : index
    %c0_6 = arith.constant 0 : index
    %3 = vector.load %arg6[%c0_5, %c0_6] : memref<18x16xf32, #tpu.memory_space<vmem>>, vector<18x16xf32>
    %cst = arith.constant dense<0.000000e+00> : vector<18x16xf32>
    %4 = tpu.matmul %0, %1, %cst {dimension_numbers = #tpu.dot_dimension_numbers<[1], [0], [0], [1], [0, 0, 1, 1], [], []>} : vector<18x8xf32>, vector<8x16xf32>, vector<18x16xf32> -> vector<18x16xf32>
    %5 = vector.broadcast %2 : vector<1x16xf32> to vector<18x16xf32>
    %6 = arith.addf %4, %5 : vector<18x16xf32>
    %cst_7 = arith.constant 0.000000e+00 : f32
    %7 = vector.broadcast %cst_7 : f32 to vector<18x16xf32>
    %8 = arith.maximumf %6, %7 : vector<18x16xf32>
    %9 = arith.mulf %8, %3 : vector<18x16xf32>
    %c0_8 = arith.constant 0 : index
    %c0_9 = arith.constant 0 : index
    %10 = vector.load %arg7[%c0_8, %c0_9] : memref<16x16xf32, #tpu.memory_space<vmem>>, vector<16x16xf32>
    %c0_10 = arith.constant 0 : index
    %c0_11 = arith.constant 0 : index
    %11 = vector.load %arg8[%c0_10, %c0_11] : memref<1x16xf32, #tpu.memory_space<vmem>>, vector<1x16xf32>
    %c0_12 = arith.constant 0 : index
    %c0_13 = arith.constant 0 : index
    %12 = vector.load %arg9[%c0_12, %c0_13] : memref<18x16xf32, #tpu.memory_space<vmem>>, vector<18x16xf32>
    %cst_14 = arith.constant dense<0.000000e+00> : vector<18x16xf32>
    %13 = tpu.matmul %9, %10, %cst_14 {dimension_numbers = #tpu.dot_dimension_numbers<[1], [0], [0], [1], [0, 0, 1, 1], [], []>} : vector<18x16xf32>, vector<16x16xf32>, vector<18x16xf32> -> vector<18x16xf32>
    %14 = vector.broadcast %11 : vector<1x16xf32> to vector<18x16xf32>
    %15 = arith.addf %13, %14 : vector<18x16xf32>
    %cst_15 = arith.constant 0.000000e+00 : f32
    %16 = vector.broadcast %cst_15 : f32 to vector<18x16xf32>
    %17 = arith.maximumf %15, %16 : vector<18x16xf32>
    %18 = arith.mulf %17, %12 : vector<18x16xf32>
    %c0_16 = arith.constant 0 : index
    %c0_17 = arith.constant 0 : index
    %19 = vector.load %arg10[%c0_16, %c0_17] : memref<18x16xf32, #tpu.memory_space<vmem>>, vector<18x16xf32>
    tpu.vector_store %arg10[%c0_16, %c0_17], %18 {strides = array<i32>} : memref<18x16xf32, #tpu.memory_space<vmem>>, vector<18x16xf32>,
    %c0_18 = arith.constant 0 : index
    %c0_19 = arith.constant 0 : index
    %20 = vector.load %arg1[%c0_18, %c0_19] : memref<256x24xf32, #tpu.memory_space<vmem>>, vector<256x24xf32>
    %c0_20 = arith.constant 0 : index
    %c0_21 = arith.constant 0 : index
    %21 = vector.load %arg2[%c0_20, %c0_21] : memref<24x16xf32, #tpu.memory_space<vmem>>, vector<24x16xf32>
    %cst_22 = arith.constant dense<0.000000e+00> : vector<256x16xf32>
    %22 = tpu.matmul %20, %21, %cst_22 {dimension_numbers = #tpu.dot_dimension_numbers<[1], [0], [0], [1], [0, 0, 1, 1], [], []>} : vector<256x24xf32>, vector<24x16xf32>, vector<256x16xf32> -> vector<256x16xf32>
    %c0_23 = arith.constant 0 : index
    %c0_24 = arith.constant 0 : index
    %23 = vector.load %arg3[%c0_23, %c0_24] : memref<1x16xf32, #tpu.memory_space<vmem>>, vector<1x16xf32>
    %24 = vector.broadcast %23 : vector<1x16xf32> to vector<256x16xf32>
    %25 = arith.addf %22, %24 : vector<256x16xf32>
    %c0_25 = arith.constant 0 : index
    %c0_26 = arith.constant 0 : index
    %26 = vector.load %arg11[%c0_25, %c0_26] : memref<256x16xf32, #tpu.memory_space<vmem>>, vector<256x16xf32>
    tpu.vector_store %arg11[%c0_25, %c0_26], %25 {strides = array<i32>} : memref<256x16xf32, #tpu.memory_space<vmem>>, vector<256x16xf32>,
    return
  }
}

</mosaic_0001>

<llo_original>
// kernel: tpu_custom_call.1
$region0: #{tpu_custom_call.1}
  #allocation0 [shape = 'u32[]', space=smem, size = 0x4, offset = 0x4, fixed_abs, tag = 'smem constant byte address 0x4 - core index']
  #allocation1 [shape = 'u32[144,128]{1,0:T(1,128)}', space=vmem, size = 0x12000, scoped, tag = 'internal scratch']
  %s0 = inlined_call_operand.vmem [shape: f32[18,8], index: 0, kind: input, shape index: {}]
  %s1 = inlined_call_operand.vmem [shape: f32[256,24], index: 1, kind: input, shape index: {}]
  %s2 = inlined_call_operand.vmem [shape: f32[24,16], index: 2, kind: input, shape index: {}]
  %s3 = inlined_call_operand.vmem [shape: f32[1,16], index: 3, kind: input, shape index: {}]
  %s4 = inlined_call_operand.vmem [shape: f32[8,16], index: 4, kind: input, shape index: {}]
  %s5 = inlined_call_operand.vmem [shape: f32[1,16], index: 5, kind: input, shape index: {}]
  %s6 = inlined_call_operand.vmem [shape: f32[18,16], index: 6, kind: input, shape index: {}]
  %s7 = inlined_call_operand.vmem [shape: f32[16,16], index: 7, kind: input, shape index: {}]
  %s8 = inlined_call_operand.vmem [shape: f32[1,16], index: 8, kind: input, shape index: {}]
  %s9 = inlined_call_operand.vmem [shape: f32[18,16], index: 9, kind: input, shape index: {}]
  %s10 = inlined_call_operand.vmem [shape: f32[18,16], index: 10, kind: output, shape index: {0}]
  %s11 = inlined_call_operand.vmem [shape: f32[256,16], index: 11, kind: output, shape index: {1}]
  %12 = xla_tuple %s10, %s11
  %s13 = sld [smem:[#allocation0]]
  $region58: #{tpu_custom_call.1} parent=0
    _
  %s15 = ssub.s32 1, %s13
  %s16 = scalar_select 0, %s15, %s13
  // Predicated region
  $region2: #{tpu_custom_call.1} parent=0 // pred_check
    _
  $region3: #{tpu_custom_call.1} parent=0 // pred_check_branch
    %18 = sbr.rel (0) target = $region5
  $region4: #{tpu_custom_call.1} parent=0 // pred_region
    _
  $region5: #{tpu_custom_call.1} parent=0 // pred_fallthru
    _
  // Predicated region
  $region6: #{tpu_custom_call.1} parent=0 // pred_check
    _
  $region7: #{tpu_custom_call.1} parent=0 // pred_check_branch
    %20 = sbr.rel (0) target = $region9
  $region8: #{tpu_custom_call.1} parent=0 // pred_region
    _
  $region9: #{tpu_custom_call.1} parent=0 // pred_fallthru
    _
  // Predicated region
  $region10: #{tpu_custom_call.1} parent=0 // pred_check
    _
  $region11: #{tpu_custom_call.1} parent=0 // pred_check_branch
    %22 = sbr.rel (0) target = $region13
  $region12: #{tpu_custom_call.1} parent=0 // pred_region
    _
  $region13: #{tpu_custom_call.1} parent=0 // pred_fallthru
    _
  // Predicated region
  $region14: #{tpu_custom_call.1} parent=0 // pred_check
    _
  $region15: #{tpu_custom_call.1} parent=0 // pred_check_branch
    %24 = sbr.rel (0) target = $region17
  $region16: #{tpu_custom_call.1} parent=0 // pred_region
    _
  $region17: #{tpu_custom_call.1} parent=0 // pred_fallthru
    _
  // Predicated region
  $region18: #{tpu_custom_call.1} parent=0 // pred_check
    _
  $region19: #{tpu_custom_call.1} parent=0 // pred_check_branch
    %26 = sbr.rel (0) target = $region21
  $region20: #{tpu_custom_call.1} parent=0 // pred_region
    _
  $region21: #{tpu_custom_call.1} parent=0 // pred_fallthru
    _
  // Predicated region
  $region22: #{tpu_custom_call.1} parent=0 // pred_check
    _
  $region23: #{tpu_custom_call.1} parent=0 // pred_check_branch
    %28 = sbr.rel (0) target = $region25
  $region24: #{tpu_custom_call.1} parent=0 // pred_region
    _
  $region25: #{tpu_custom_call.1} parent=0 // pred_fallthru
    _
  // Predicated region
  $region26: #{tpu_custom_call.1} parent=0 // pred_check
    _
  $region27: #{tpu_custom_call.1} parent=0 // pred_check_branch
    %30 = sbr.rel (0) target = $region29
  $region28: #{tpu_custom_call.1} parent=0 // pred_region
    _
  $region29: #{tpu_custom_call.1} parent=0 // pred_fallthru
    _
  // Predicated region
  $region30: #{tpu_custom_call.1} parent=0 // pred_check
    _
  $region31: #{tpu_custom_call.1} parent=0 // pred_check_branch
    %32 = sbr.rel (0) target = $region33
  $region32: #{tpu_custom_call.1} parent=0 // pred_region
    _
  $region33: #{tpu_custom_call.1} parent=0 // pred_fallthru
    _
  // Predicated region
  $region34: #{tpu_custom_call.1} parent=0 // pred_check
    _
  $region35: #{tpu_custom_call.1} parent=0 // pred_check_branch
    %34 = sbr.rel (0) target = $region37
  $region36: #{tpu_custom_call.1} parent=0 // pred_region
    _
  $region37: #{tpu_custom_call.1} parent=0 // pred_fallthru
    _
  // Predicated region
  $region38: #{tpu_custom_call.1} parent=0 // pred_check
    _
  $region39: #{tpu_custom_call.1} parent=0 // pred_check_branch
    %36 = sbr.rel (0) target = $region41
  $region40: #{tpu_custom_call.1} parent=0 // pred_region
    _
  $region41: #{tpu_custom_call.1} parent=0 // pred_fallthru
    _
  %v37 = vld [vmem:[%s0] sm:$0xff]
  %v38 = vld [vmem:[%s0 + $0x8] sm:$0xff]
  %v39 = vld [vmem:[%s0 + $0x10] sm:$0x3]
  %v40 = vld [vmem:[%s4] sm:$0xff]
  %v41 = vld [vmem:[%s5] sm:$0x1]
  %v42 = vld [vmem:[%s6] sm:$0xff]
  %v43 = vld [vmem:[%s6 + $0x8] sm:$0xff]
  %v44 = vld [vmem:[%s6 + $0x10] sm:$0x3]
  %v46 = vlaneseq
  %v47 = vshrl.u32 %v46, 7
  %v48 = vsub.s32 0, %v47
  %v49 = vrot.slane %v41, %v48
  %vm51 = vcmask 64512
  %v53 = vsel %vm51, %v37, 0
  %v56 = vsel %vm51, %v38, 0
  %v59 = vsel %vm51, %v39, 0
  %61 = vmatprep.subr.mxu0 0.0
  %62 = vmatpush1.msra.mxu0 0.0
  %63 = vmatprep.subr.mxu0 0.0
  %64 = vmatpush1.msra.mxu0 0.0
  %65 = vmatprep.subr.mxu0 0.0
  %66 = vmatpush1.msra.mxu0 0.0
  %67 = vmatprep.subr.mxu0 0.0
  %68 = vmatpush1.msra.mxu0 0.0
  %69 = vmatprep.subr.mxu0 0.0
  %70 = vmatpush1.msra.mxu0 0.0
  %71 = vmatprep.subr.mxu0 0.0
  %72 = vmatpush1.msra.mxu0 0.0
  %73 = vmatprep.subr.mxu0 0.0
  %74 = vmatpush1.msra.mxu0 0.0
  %75 = vmatprep.subr.mxu0 0.0
  %76 = vmatpush1.msra.mxu0 0.0
  %77 = vmatprep.subr.mxu0 0.0
  %78 = vmatpush1.msra.mxu0 0.0
  %79 = vmatprep.subr.mxu0 0.0
  %80 = vmatpush1.msra.mxu0 0.0
  %81 = vmatprep.subr.mxu0 0.0
  %82 = vmatpush1.msra.mxu0 0.0
  %83 = vmatprep.subr.mxu0 0.0
  %84 = vmatpush1.msra.mxu0 0.0
  %85 = vmatprep.subr.mxu0 0.0
  %86 = vmatpush1.msra.mxu0 0.0
  %87 = vmatprep.subr.mxu0 0.0
  %88 = vmatpush1.msra.mxu0 0.0
  %89 = vmatprep.subr.mxu0 0.0
  %90 = vmatpush1.msra.mxu0 0.0
  %91 = vmatprep.subr.mxu0 0.0
  %92 = vmatpush1.msra.mxu0 %v40
  %93 = vmatprep.subr.mxu0 0.0
  %94 = vmatpush2.msra.mxu0 0.0
  %95 = vmatprep.subr.mxu0 0.0
  %96 = vmatpush2.msra.mxu0 0.0
  %97 = vmatprep.subr.mxu0 0.0
  %98 = vmatpush2.msra.mxu0 0.0
  %99 = vmatprep.subr.mxu0 0.0
  %100 = vmatpush2.msra.mxu0 0.0
  %101 = vmatprep.subr.mxu0 0.0
  %102 = vmatpush2.msra.mxu0 0.0
  %103 = vmatprep.subr.mxu0 0.0
  %104 = vmatpush2.msra.mxu0 0.0
  %105 = vmatprep.subr.mxu0 0.0
  %106 = vmatpush2.msra.mxu0 0.0
  %107 = vmatprep.subr.mxu0 0.0
  %108 = vmatpush2.msra.mxu0 0.0
  %109 = vmatprep.subr.mxu0 0.0
  %110 = vmatpush2.msra.mxu0 0.0
  %111 = vmatprep.subr.mxu0 0.0
  %112 = vmatpush2.msra.mxu0 0.0
  %113 = vmatprep.subr.mxu0 0.0
  %114 = vmatpush2.msra.mxu0 0.0
  %115 = vmatprep.subr.mxu0 0.0
  %116 = vmatpush2.msra.mxu0 0.0
  %117 = vmatprep.subr.mxu0 0.0
  %118 = vmatpush2.msra.mxu0 0.0
  %119 = vmatprep.subr.mxu0 0.0
  %120 = vmatpush2.msra.mxu0 0.0
  %121 = vmatprep.subr.mxu0 0.0
  %122 = vmatpush2.msra.mxu0 0.0
  %123 = vmatprep.subr.mxu0 0.0
  %124 = vmatpush2.msra.mxu0 0.0
  %125 = vmatprep.mubr.f32.mxu0 0.0
  %126 = vmatmul.mubr.f32.gmra.mxu0 %v53
  %v127 = vpop.f32.mrf.mxu0
  %v128 = vadd.f32 %v49, %v127
  %v129 = vpop.f32.mrf.mxu0
  %130 = vmatprep.mubr.f32.mxu0 0.0
  %131 = vmatmul.mubr.f32.gmra.mxu0 %v56
  %v132 = vpop.f32.mrf.mxu0
  %v133 = vadd.f32 %v49, %v132
  %v134 = vpop.f32.mrf.mxu0
  %135 = vmatprep.mubr.f32.mxu0 0.0
  %136 = vmatmul.mubr.f32.gmra.mxu0 %v59
  %v137 = vpop.f32.mrf.mxu0
  %v138 = vadd.f32 %v49, %v137
  %v139 = vpop.f32.mrf.mxu0
  %140 = vdwg.mxu0
  %v141 = vmax.f32 %v128, 0.0
  %v142 = vmax.f32 %v133, 0.0
  %v143 = vmax.f32 %v138, 0.0
  %v144 = vmul.f32 %v141, %v42
  %v145 = vmul.f32 %v142, %v43
  %v146 = vmul.f32 %v143, %v44
  %v147 = vld [vmem:[%s7] sm:$0xff]
  %v148 = vld [vmem:[%s7 + $0x8] sm:$0xff]
  %v149 = vld [vmem:[%s8] sm:$0x1]
  %v150 = vld [vmem:[%s9] sm:$0xff]
  %v151 = vld [vmem:[%s9 + $0x8] sm:$0xff]
  %v152 = vld [vmem:[%s9 + $0x10] sm:$0x3]
  %v154 = vlaneseq
  %v155 = vshrl.u32 %v154, 7
  %v156 = vsub.s32 0, %v155
  %v157 = vrot.slane %v149, %v156
  %vm159 = vcmask 130048
  %v161 = vsel %vm159, %v144, 0
  %v164 = vsel %vm159, %v145, 0
  %v167 = vsel %vm159, %v146, 0
  %169 = vmatprep.subr.mxu0 0.0
  %170 = vmatpush1.msra.mxu0 0.0
  %171 = vmatprep.subr.mxu0 0.0
  %172 = vmatpush1.msra.mxu0 0.0
  %173 = vmatprep.subr.mxu0 0.0
  %174 = vmatpush1.msra.mxu0 0.0
  %175 = vmatprep.subr.mxu0 0.0
  %176 = vmatpush1.msra.mxu0 0.0
  %177 = vmatprep.subr.mxu0 0.0
  %178 = vmatpush1.msra.mxu0 0.0
  %179 = vmatprep.subr.mxu0 0.0
  %180 = vmatpush1.msra.mxu0 0.0
  %181 = vmatprep.subr.mxu0 0.0
  %182 = vmatpush1.msra.mxu0 0.0
  %183 = vmatprep.subr.mxu0 0.0
  %184 = vmatpush1.msra.mxu0 0.0
  %185 = vmatprep.subr.mxu0 0.0
  %186 = vmatpush1.msra.mxu0 0.0
  %187 = vmatprep.subr.mxu0 0.0
  %188 = vmatpush1.msra.mxu0 0.0
  %189 = vmatprep.subr.mxu0 0.0
  %190 = vmatpush1.msra.mxu0 0.0
  %191 = vmatprep.subr.mxu0 0.0
  %192 = vmatpush1.msra.mxu0 0.0
  %193 = vmatprep.subr.mxu0 0.0
  %194 = vmatpush1.msra.mxu0 0.0
  %195 = vmatprep.subr.mxu0 0.0
  %196 = vmatpush1.msra.mxu0 0.0
  %197 = vmatprep.subr.mxu0 0.0
  %198 = vmatpush1.msra.mxu0 %v148
  %199 = vmatprep.subr.mxu0 0.0
  %200 = vmatpush1.msra.mxu0 %v147
  %201 = vmatprep.subr.mxu0 0.0
  %202 = vmatpush2.msra.mxu0 0.0
  %203 = vmatprep.subr.mxu0 0.0
  %204 = vmatpush2.msra.mxu0 0.0
  %205 = vmatprep.subr.mxu0 0.0
  %206 = vmatpush2.msra.mxu0 0.0
  %207 = vmatprep.subr.mxu0 0.0
  %208 = vmatpush2.msra.mxu0 0.0
  %209 = vmatprep.subr.mxu0 0.0
  %210 = vmatpush2.msra.mxu0 0.0
  %211 = vmatprep.subr.mxu0 0.0
  %212 = vmatpush2.msra.mxu0 0.0
  %213 = vmatprep.subr.mxu0 0.0
  %214 = vmatpush2.msra.mxu0 0.0
  %215 = vmatprep.subr.mxu0 0.0
  %216 = vmatpush2.msra.mxu0 0.0
  %217 = vmatprep.subr.mxu0 0.0
  %218 = vmatpush2.msra.mxu0 0.0
  %219 = vmatprep.subr.mxu0 0.0
  %220 = vmatpush2.msra.mxu0 0.0
  %221 = vmatprep.subr.mxu0 0.0
  %222 = vmatpush2.msra.mxu0 0.0
  %223 = vmatprep.subr.mxu0 0.0
  %224 = vmatpush2.msra.mxu0 0.0
  %225 = vmatprep.subr.mxu0 0.0
  %226 = vmatpush2.msra.mxu0 0.0
  %227 = vmatprep.subr.mxu0 0.0
  %228 = vmatpush2.msra.mxu0 0.0
  %229 = vmatprep.subr.mxu0 0.0
  %230 = vmatpush2.msra.mxu0 0.0
  %231 = vmatprep.subr.mxu0 0.0
  %232 = vmatpush2.msra.mxu0 0.0
  %233 = vmatprep.mubr.f32.mxu0 0.0
  %234 = vmatmul.mubr.f32.gmra.mxu0 %v161
  %v235 = vpop.f32.mrf.mxu0
  %v236 = vadd.f32 %v157, %v235
  %v237 = vpop.f32.mrf.mxu0
  %238 = vmatprep.mubr.f32.mxu0 0.0
  %239 = vmatmul.mubr.f32.gmra.mxu0 %v164
  %v240 = vpop.f32.mrf.mxu0
  %v241 = vadd.f32 %v157, %v240
  %v242 = vpop.f32.mrf.mxu0
  %243 = vmatprep.mubr.f32.mxu0 0.0
  %244 = vmatmul.mubr.f32.gmra.mxu0 %v167
  %v245 = vpop.f32.mrf.mxu0
  %v246 = vadd.f32 %v157, %v245
  %v247 = vpop.f32.mrf.mxu0
  %248 = vdwg.mxu0
  %v249 = vmax.f32 %v236, 0.0
  %v250 = vmax.f32 %v241, 0.0
  %v251 = vmax.f32 %v246, 0.0
  %v252 = vmul.f32 %v249, %v150
  %v253 = vmul.f32 %v250, %v151
  %v254 = vmul.f32 %v251, %v152
  %255 = vst.msk [vmem:[%s10] sm:$0xff] %vm159, %v252
  %256 = vst.msk [vmem:[%s10 + $0x8] sm:$0xff] %vm159, %v253
  %vm257 = vcmask 123904
  %258 = vst.msk [vmem:[%s10 + $0x10] sm:$0x3] %vm257, %v254
  %v259 = vld [vmem:[%s1] sm:$0xff]
  %v260 = vld [vmem:[%s1 + $0x8] sm:$0xff]
  %v261 = vld [vmem:[%s1 + $0x10] sm:$0xff]
  %v262 = vld [vmem:[%s1 + $0x18] sm:$0xff]
  %v263 = vld [vmem:[%s1 + $0x20] sm:$0xff]
  %v264 = vld [vmem:[%s1 + $0x28] sm:$0xff]
  %v265 = vld [vmem:[%s1 + $0x30] sm:$0xff]
  %v266 = vld [vmem:[%s1 + $0x38] sm:$0xff]
  %v267 = vld [vmem:[%s1 + $0x40] sm:$0xff]
  %v268 = vld [vmem:[%s1 + $0x48] sm:$0xff]
  %v269 = vld [vmem:[%s1 + $0x50] sm:$0xff]
  %v270 = vld [vmem:[%s1 + $0x58] sm:$0xff]
  %v271 = vld [vmem:[%s1 + $0x60] sm:$0xff]
  %v272 = vld [vmem:[%s1 + $0x68] sm:$0xff]
  %v273 = vld [vmem:[%s1 + $0x70] sm:$0xff]
  %v274 = vld [vmem:[%s1 + $0x78] sm:$0xff]
  %v275 = vld [vmem:[%s1 + $0x80] sm:$0xff]
  %v276 = vld [vmem:[%s1 + $0x88] sm:$0xff]
  %v277 = vld [vmem:[%s1 + $0x90] sm:$0xff]
  %v278 = vld [vmem:[%s1 + $0x98] sm:$0xff]
  %v279 = vld [vmem:[%s1 + $0xa0] sm:$0xff]
  %v280 = vld [vmem:[%s1 + $0xa8] sm:$0xff]
  %v281 = vld [vmem:[%s1 + $0xb0] sm:$0xff]
  %v282 = vld [vmem:[%s1 + $0xb8] sm:$0xff]
  %v283 = vld [vmem:[%s1 + $0xc0] sm:$0xff]
  %v284 = vld [vmem:[%s1 + $0xc8] sm:$0xff]
  %v285 = vld [vmem:[%s1 + $0xd0] sm:$0xff]
  %v286 = vld [vmem:[%s1 + $0xd8] sm:$0xff]
  %v287 = vld [vmem:[%s1 + $0xe0] sm:$0xff]
  %v288 = vld [vmem:[%s1 + $0xe8] sm:$0xff]
  %v289 = vld [vmem:[%s1 + $0xf0] sm:$0xff]
  %v290 = vld [vmem:[%s1 + $0xf8] sm:$0xff]
  %v291 = vld [vmem:[%s2] sm:$0xff]
  %v292 = vld [vmem:[%s2 + $0x8] sm:$0xff]
  %v293 = vld [vmem:[%s2 + $0x10] sm:$0xff]
  %v294 = vld [vmem:[%s3] sm:$0x1]
  %v296 = vlaneseq
  %v297 = vshrl.u32 %v296, 7
  %v298 = vsub.s32 0, %v297
  %v299 = vrot.slane %v294, %v298
  %vm301 = vcmask 195584
  %v303 = vsel %vm301, %v259, 0
  %v306 = vsel %vm301, %v260, 0
  %v309 = vsel %vm301, %v261, 0
  %v312 = vsel %vm301, %v262, 0
  %v315 = vsel %vm301, %v263, 0
  %v318 = vsel %vm301, %v264, 0
  %v321 = vsel %vm301, %v265, 0
  %v324 = vsel %vm301, %v266, 0
  %v327 = vsel %vm301, %v267, 0
  %v330 = vsel %vm301, %v268, 0
  %v333 = vsel %vm301, %v269, 0
  %v336 = vsel %vm301, %v270, 0
  %v339 = vsel %vm301, %v271, 0
  %v342 = vsel %vm301, %v272, 0
  %v345 = vsel %vm301, %v273, 0
  %v348 = vsel %vm301, %v274, 0
  %v351 = vsel %vm301, %v275, 0
  %v354 = vsel %vm301, %v276, 0
  %v357 = vsel %vm301, %v277, 0
  %v360 = vsel %vm301, %v278, 0
  %v363 = vsel %vm301, %v279, 0
  %v366 = vsel %vm301, %v280, 0
  %v369 = vsel %vm301, %v281, 0
  %v372 = vsel %vm301, %v282, 0
  %v375 = vsel %vm301, %v283, 0
  %v378 = vsel %vm301, %v284, 0
  %v381 = vsel %vm301, %v285, 0
  %v384 = vsel %vm301, %v286, 0
  %v387 = vsel %vm301, %v287, 0
  %v390 = vsel %vm301, %v288, 0
  %v393 = vsel %vm301, %v289, 0
  %v396 = vsel %vm301, %v290, 0
  %398 = vmatprep.subr.mxu0 0.0
  %399 = vmatpush1.msra.mxu0 0.0
  %400 = vmatprep.subr.mxu0 0.0
  %401 = vmatpush1.msra.mxu0 0.0
  %402 = vmatprep.subr.mxu0 0.0
  %403 = vmatpush1.msra.mxu0 0.0
  %404 = vmatprep.subr.mxu0 0.0
  %405 = vmatpush1.msra.mxu0 0.0
  %406 = vmatprep.subr.mxu0 0.0
  %407 = vmatpush1.msra.mxu0 0.0
  %408 = vmatprep.subr.mxu0 0.0
  %409 = vmatpush1.msra.mxu0 0.0
  %410 = vmatprep.subr.mxu0 0.0
  %411 = vmatpush1.msra.mxu0 0.0
  %412 = vmatprep.subr.mxu0 0.0
  %413 = vmatpush1.msra.mxu0 0.0
  %414 = vmatprep.subr.mxu0 0.0
  %415 = vmatpush1.msra.mxu0 0.0
  %416 = vmatprep.subr.mxu0 0.0
  %417 = vmatpush1.msra.mxu0 0.0
  %418 = vmatprep.subr.mxu0 0.0
  %419 = vmatpush1.msra.mxu0 0.0
  %420 = vmatprep.subr.mxu0 0.0
  %421 = vmatpush1.msra.mxu0 0.0
  %422 = vmatprep.subr.mxu0 0.0
  %423 = vmatpush1.msra.mxu0 0.0
  %424 = vmatprep.subr.mxu0 0.0
  %425 = vmatpush1.msra.mxu0 %v293
  %426 = vmatprep.subr.mxu0 0.0
  %427 = vmatpush1.msra.mxu0 %v292
  %428 = vmatprep.subr.mxu0 0.0
  %429 = vmatpush1.msra.mxu0 %v291
  %430 = vmatprep.subr.mxu0 0.0
  %431 = vmatpush2.msra.mxu0 0.0
  %432 = vmatprep.subr.mxu0 0.0
  %433 = vmatpush2.msra.mxu0 0.0
  %434 = vmatprep.subr.mxu0 0.0
  %435 = vmatpush2.msra.mxu0 0.0
  %436 = vmatprep.subr.mxu0 0.0
  %437 = vmatpush2.msra.mxu0 0.0
  %438 = vmatprep.subr.mxu0 0.0
  %439 = vmatpush2.msra.mxu0 0.0
  %440 = vmatprep.subr.mxu0 0.0
  %441 = vmatpush2.msra.mxu0 0.0
  %442 = vmatprep.subr.mxu0 0.0
  %443 = vmatpush2.msra.mxu0 0.0
  %444 = vmatprep.subr.mxu0 0.0
  %445 = vmatpush2.msra.mxu0 0.0
  %446 = vmatprep.subr.mxu0 0.0
  %447 = vmatpush2.msra.mxu0 0.0
  %448 = vmatprep.subr.mxu0 0.0
  %449 = vmatpush2.msra.mxu0 0.0
  %450 = vmatprep.subr.mxu0 0.0
  %451 = vmatpush2.msra.mxu0 0.0
  %452 = vmatprep.subr.mxu0 0.0
  %453 = vmatpush2.msra.mxu0 0.0
  %454 = vmatprep.subr.mxu0 0.0
  %455 = vmatpush2.msra.mxu0 0.0
  %456 = vmatprep.subr.mxu0 0.0
  %457 = vmatpush2.msra.mxu0 0.0
  %458 = vmatprep.subr.mxu0 0.0
  %459 = vmatpush2.msra.mxu0 0.0
  %460 = vmatprep.subr.mxu0 0.0
  %461 = vmatpush2.msra.mxu0 0.0
  %462 = vmatprep.mubr.f32.mxu0 0.0
  %463 = vmatmul.mubr.f32.gmra.mxu0 %v303
  %v464 = vpop.f32.mrf.mxu0
  %v465 = vadd.f32 %v299, %v464
  %v466 = vpop.f32.mrf.mxu0
  %467 = vmatprep.mubr.f32.mxu0 0.0
  %468 = vmatmul.mubr.f32.gmra.mxu0 %v306
  %v469 = vpop.f32.mrf.mxu0
  %v470 = vadd.f32 %v299, %v469
  %v471 = vpop.f32.mrf.mxu0
  %472 = vmatprep.mubr.f32.mxu0 0.0
  %473 = vmatmul.mubr.f32.gmra.mxu0 %v309
  %v474 = vpop.f32.mrf.mxu0
  %v475 = vadd.f32 %v299, %v474
  %v476 = vpop.f32.mrf.mxu0
  %477 = vmatprep.mubr.f32.mxu0 0.0
  %478 = vmatmul.mubr.f32.gmra.mxu0 %v312
  %v479 = vpop.f32.mrf.mxu0
  %v480 = vadd.f32 %v299, %v479
  %v481 = vpop.f32.mrf.mxu0
  %482 = vmatprep.mubr.f32.mxu0 0.0
  %483 = vmatmul.mubr.f32.gmra.mxu0 %v315
  %v484 = vpop.f32.mrf.mxu0
  %v485 = vadd.f32 %v299, %v484
  %v486 = vpop.f32.mrf.mxu0
  %487 = vmatprep.mubr.f32.mxu0 0.0
  %488 = vmatmul.mubr.f32.gmra.mxu0 %v318
  %v489 = vpop.f32.mrf.mxu0
  %v490 = vadd.f32 %v299, %v489
  %v491 = vpop.f32.mrf.mxu0
  %492 = vmatprep.mubr.f32.mxu0 0.0
  %493 = vmatmul.mubr.f32.gmra.mxu0 %v321
  %v494 = vpop.f32.mrf.mxu0
  %v495 = vadd.f32 %v299, %v494
  %v496 = vpop.f32.mrf.mxu0
  %497 = vmatprep.mubr.f32.mxu0 0.0
  %498 = vmatmul.mubr.f32.gmra.mxu0 %v324
  %v499 = vpop.f32.mrf.mxu0
  %v500 = vadd.f32 %v299, %v499
  %v501 = vpop.f32.mrf.mxu0
  %502 = vmatprep.mubr.f32.mxu0 0.0
  %503 = vmatmul.mubr.f32.gmra.mxu0 %v327
  %v504 = vpop.f32.mrf.mxu0
  %v505 = vadd.f32 %v299, %v504
  %v506 = vpop.f32.mrf.mxu0
  %507 = vmatprep.mubr.f32.mxu0 0.0
  %508 = vmatmul.mubr.f32.gmra.mxu0 %v330
  %v509 = vpop.f32.mrf.mxu0
  %v510 = vadd.f32 %v299, %v509
  %v511 = vpop.f32.mrf.mxu0
  %512 = vmatprep.mubr.f32.mxu0 0.0
  %513 = vmatmul.mubr.f32.gmra.mxu0 %v333
  %v514 = vpop.f32.mrf.mxu0
  %v515 = vadd.f32 %v299, %v514
  %v516 = vpop.f32.mrf.mxu0
  %517 = vmatprep.mubr.f32.mxu0 0.0
  %518 = vmatmul.mubr.f32.gmra.mxu0 %v336
  %v519 = vpop.f32.mrf.mxu0
  %v520 = vadd.f32 %v299, %v519
  %v521 = vpop.f32.mrf.mxu0
  %522 = vmatprep.mubr.f32.mxu0 0.0
  %523 = vmatmul.mubr.f32.gmra.mxu0 %v339
  %v524 = vpop.f32.mrf.mxu0
  %v525 = vadd.f32 %v299, %v524
  %v526 = vpop.f32.mrf.mxu0
  %527 = vmatprep.mubr.f32.mxu0 0.0
  %528 = vmatmul.mubr.f32.gmra.mxu0 %v342
  %v529 = vpop.f32.mrf.mxu0
  %v530 = vadd.f32 %v299, %v529
  %v531 = vpop.f32.mrf.mxu0
  %532 = vmatprep.mubr.f32.mxu0 0.0
  %533 = vmatmul.mubr.f32.gmra.mxu0 %v345
  %v534 = vpop.f32.mrf.mxu0
  %v535 = vadd.f32 %v299, %v534
  %v536 = vpop.f32.mrf.mxu0
  %537 = vmatprep.mubr.f32.mxu0 0.0
  %538 = vmatmul.mubr.f32.gmra.mxu0 %v348
  %v539 = vpop.f32.mrf.mxu0
  %v540 = vadd.f32 %v299, %v539
  %v541 = vpop.f32.mrf.mxu0
  %542 = vmatprep.mubr.f32.mxu0 0.0
  %543 = vmatmul.mubr.f32.gmra.mxu0 %v351
  %v544 = vpop.f32.mrf.mxu0
  %v545 = vadd.f32 %v299, %v544
  %v546 = vpop.f32.mrf.mxu0
  %547 = vmatprep.mubr.f32.mxu0 0.0
  %548 = vmatmul.mubr.f32.gmra.mxu0 %v354
  %v549 = vpop.f32.mrf.mxu0
  %v550 = vadd.f32 %v299, %v549
  %v551 = vpop.f32.mrf.mxu0
  %552 = vmatprep.mubr.f32.mxu0 0.0
  %553 = vmatmul.mubr.f32.gmra.mxu0 %v357
  %v554 = vpop.f32.mrf.mxu0
  %v555 = vadd.f32 %v299, %v554
  %v556 = vpop.f32.mrf.mxu0
  %557 = vmatprep.mubr.f32.mxu0 0.0
  %558 = vmatmul.mubr.f32.gmra.mxu0 %v360
  %v559 = vpop.f32.mrf.mxu0
  %v560 = vadd.f32 %v299, %v559
  %v561 = vpop.f32.mrf.mxu0
  %562 = vmatprep.mubr.f32.mxu0 0.0
  %563 = vmatmul.mubr.f32.gmra.mxu0 %v363
  %v564 = vpop.f32.mrf.mxu0
  %v565 = vadd.f32 %v299, %v564
  %v566 = vpop.f32.mrf.mxu0
  %567 = vmatprep.mubr.f32.mxu0 0.0
  %568 = vmatmul.mubr.f32.gmra.mxu0 %v366
  %v569 = vpop.f32.mrf.mxu0
  %v570 = vadd.f32 %v299, %v569
  %v571 = vpop.f32.mrf.mxu0
  %572 = vmatprep.mubr.f32.mxu0 0.0
  %573 = vmatmul.mubr.f32.gmra.mxu0 %v369
  %v574 = vpop.f32.mrf.mxu0
  %v575 = vadd.f32 %v299, %v574
  %v576 = vpop.f32.mrf.mxu0
  %577 = vmatprep.mubr.f32.mxu0 0.0
  %578 = vmatmul.mubr.f32.gmra.mxu0 %v372
  %v579 = vpop.f32.mrf.mxu0
  %v580 = vadd.f32 %v299, %v579
  %v581 = vpop.f32.mrf.mxu0
  %582 = vmatprep.mubr.f32.mxu0 0.0
  %583 = vmatmul.mubr.f32.gmra.mxu0 %v375
  %v584 = vpop.f32.mrf.mxu0
  %v585 = vadd.f32 %v299, %v584
  %v586 = vpop.f32.mrf.mxu0
  %587 = vmatprep.mubr.f32.mxu0 0.0
  %588 = vmatmul.mubr.f32.gmra.mxu0 %v378
  %v589 = vpop.f32.mrf.mxu0
  %v590 = vadd.f32 %v299, %v589
  %v591 = vpop.f32.mrf.mxu0
  %592 = vmatprep.mubr.f32.mxu0 0.0
  %593 = vmatmul.mubr.f32.gmra.mxu0 %v381
  %v594 = vpop.f32.mrf.mxu0
  %v595 = vadd.f32 %v299, %v594
  %v596 = vpop.f32.mrf.mxu0
  %597 = vmatprep.mubr.f32.mxu0 0.0
  %598 = vmatmul.mubr.f32.gmra.mxu0 %v384
  %v599 = vpop.f32.mrf.mxu0
  %v600 = vadd.f32 %v299, %v599
  %v601 = vpop.f32.mrf.mxu0
  %602 = vmatprep.mubr.f32.mxu0 0.0
  %603 = vmatmul.mubr.f32.gmra.mxu0 %v387
  %v604 = vpop.f32.mrf.mxu0
  %v605 = vadd.f32 %v299, %v604
  %v606 = vpop.f32.mrf.mxu0
  %607 = vmatprep.mubr.f32.mxu0 0.0
  %608 = vmatmul.mubr.f32.gmra.mxu0 %v390
  %v609 = vpop.f32.mrf.mxu0
  %v610 = vadd.f32 %v299, %v609
  %v611 = vpop.f32.mrf.mxu0
  %612 = vmatprep.mubr.f32.mxu0 0.0
  %613 = vmatmul.mubr.f32.gmra.mxu0 %v393
  %v614 = vpop.f32.mrf.mxu0
  %v615 = vadd.f32 %v299, %v614
  %v616 = vpop.f32.mrf.mxu0
  %617 = vmatprep.mubr.f32.mxu0 0.0
  %618 = vmatmul.mubr.f32.gmra.mxu0 %v396
  %v619 = vpop.f32.mrf.mxu0
  %v620 = vadd.f32 %v299, %v619
  %v621 = vpop.f32.mrf.mxu0
  %622 = vdwg.mxu0
  %623 = vst.msk [vmem:[%s11] sm:$0xff] %vm159, %v465
  %624 = vst.msk [vmem:[%s11 + $0x8] sm:$0xff] %vm159, %v470
  %625 = vst.msk [vmem:[%s11 + $0x10] sm:$0xff] %vm159, %v475
  %626 = vst.msk [vmem:[%s11 + $0x18] sm:$0xff] %vm159, %v480
  %627 = vst.msk [vmem:[%s11 + $0x20] sm:$0xff] %vm159, %v485
  %628 = vst.msk [vmem:[%s11 + $0x28] sm:$0xff] %vm159, %v490
  %629 = vst.msk [vmem:[%s11 + $0x30] sm:$0xff] %vm159, %v495
  %630 = vst.msk [vmem:[%s11 + $0x38] sm:$0xff] %vm159, %v500
  %631 = vst.msk [vmem:[%s11 + $0x40] sm:$0xff] %vm159, %v505
  %632 = vst.msk [vmem:[%s11 + $0x48] sm:$0xff] %vm159, %v510
  %633 = vst.msk [vmem:[%s11 + $0x50] sm:$0xff] %vm159, %v515
  %634 = vst.msk [vmem:[%s11 + $0x58] sm:$0xff] %vm159, %v520
  %635 = vst.msk [vmem:[%s11 + $0x60] sm:$0xff] %vm159, %v525
  %636 = vst.msk [vmem:[%s11 + $0x68] sm:$0xff] %vm159, %v530
  %637 = vst.msk [vmem:[%s11 + $0x70] sm:$0xff] %vm159, %v535
  %638 = vst.msk [vmem:[%s11 + $0x78] sm:$0xff] %vm159, %v540
  %639 = vst.msk [vmem:[%s11 + $0x80] sm:$0xff] %vm159, %v545
  %640 = vst.msk [vmem:[%s11 + $0x88] sm:$0xff] %vm159, %v550
  %641 = vst.msk [vmem:[%s11 + $0x90] sm:$0xff] %vm159, %v555
  %642 = vst.msk [vmem:[%s11 + $0x98] sm:$0xff] %vm159, %v560
  %643 = vst.msk [vmem:[%s11 + $0xa0] sm:$0xff] %vm159, %v565
  %644 = vst.msk [vmem:[%s11 + $0xa8] sm:$0xff] %vm159, %v570
  %645 = vst.msk [vmem:[%s11 + $0xb0] sm:$0xff] %vm159, %v575
  %646 = vst.msk [vmem:[%s11 + $0xb8] sm:$0xff] %vm159, %v580
  %647 = vst.msk [vmem:[%s11 + $0xc0] sm:$0xff] %vm159, %v585
  %648 = vst.msk [vmem:[%s11 + $0xc8] sm:$0xff] %vm159, %v590
  %649 = vst.msk [vmem:[%s11 + $0xd0] sm:$0xff] %vm159, %v595
  %650 = vst.msk [vmem:[%s11 + $0xd8] sm:$0xff] %vm159, %v600
  %651 = vst.msk [vmem:[%s11 + $0xe0] sm:$0xff] %vm159, %v605
  %652 = vst.msk [vmem:[%s11 + $0xe8] sm:$0xff] %vm159, %v610
  %653 = vst.msk [vmem:[%s11 + $0xf0] sm:$0xff] %vm159, %v615
  %654 = vst.msk [vmem:[%s11 + $0xf8] sm:$0xff] %vm159, %v620
  // Predicated region
  $region42: #{tpu_custom_call.1} parent=0 // pred_check
    _
  $region43: #{tpu_custom_call.1} parent=0 // pred_check_branch
    %656 = sbr.rel (0) target = $region45
  $region44: #{tpu_custom_call.1} parent=0 // pred_region
    _
  $region45: #{tpu_custom_call.1} parent=0 // pred_fallthru
    _
  // Predicated region
  $region46: #{tpu_custom_call.1} parent=0 // pred_check
    _
  $region47: #{tpu_custom_call.1} parent=0 // pred_check_branch
    %658 = sbr.rel (0) target = $region49
  $region48: #{tpu_custom_call.1} parent=0 // pred_region
    _
  $region49: #{tpu_custom_call.1} parent=0 // pred_fallthru
    _
  // Predicated region
  $region50: #{tpu_custom_call.1} parent=0 // pred_check
    _
  $region51: #{tpu_custom_call.1} parent=0 // pred_check_branch
    %660 = sbr.rel (0) target = $region53
  $region52: #{tpu_custom_call.1} parent=0 // pred_region
    _
  $region53: #{tpu_custom_call.1} parent=0 // pred_fallthru
    _
  // Predicated region
  $region54: #{tpu_custom_call.1} parent=0 // pred_check
    _
  $region55: #{tpu_custom_call.1} parent=0 // pred_check_branch
    %662 = sbr.rel (0) target = $region57
  $region56: #{tpu_custom_call.1} parent=0 // pred_region
    _
  $region57: #{tpu_custom_call.1} parent=0 // pred_fallthru
    _

</llo_original>
